<compile_context>
chip_gen: v5e
topology: v5e:2x2
jax: 0.10.0
libtpu: 0.0.40
codegen_flags: <defaults>
</compile_context>

<pallas_src>
import functools

import jax
import jax.numpy as jnp
import numpy as np
from jax.experimental import pallas as pl
from jax.experimental.pallas import tpu as pltpu


def _rotation3d_kernel(m_ref, out_ref, *, height, width, eps):
    """m_ref: (B, 9) f32 in SMEM, out_ref: (1, TH, 2*W) f32 block in VMEM."""
    bi = pl.program_id(0)          # batch index
    ri = pl.program_id(1)          # row-block index

    th = out_ref.shape[1]          # rows in this block (static)
    w2 = out_ref.shape[2]          # 2 * width (static)

    # Pixel coordinates generated in-kernel (no HBM-resident grid).
    lane = jax.lax.broadcasted_iota(jnp.int32, (1, th, w2), 2)
    row = jax.lax.broadcasted_iota(jnp.int32, (1, th, w2), 1)
    x = (lane >> 1).astype(jnp.float32)            # pixel column
    chan = lane & 1                                # 0 -> px, 1 -> py
    y = (row + ri * th).astype(jnp.float32)        # pixel row (global)

    # Per-batch 3x3 projection matrix coefficients from SMEM (scalar reads).
    m00 = m_ref[bi, 0]; m01 = m_ref[bi, 1]; m02 = m_ref[bi, 2]
    m10 = m_ref[bi, 3]; m11 = m_ref[bi, 4]; m12 = m_ref[bi, 5]
    m20 = m_ref[bi, 6]; m21 = m_ref[bi, 7]; m22 = m_ref[bi, 8]

    # rot = M @ [x, y, 1]  as broadcast VPU FMAs (no MXU).
    u = m00 * x + m01 * y + m02
    v = m10 * x + m11 * y + m12
    w = m20 * x + m21 * y + m22

    inv_w = pl.reciprocal(w + eps)        # exact (approx would break 1e-4 tol)
    sx = 2.0 / (width - 1.0)
    sy = 2.0 / (height - 1.0)

    px = u * inv_w * sx - 1.0
    py = v * inv_w * sy - 1.0

    # Interleaved lane layout: even lanes = px, odd lanes = py.
    out_ref[...] = jnp.where(chan == 0, px, py)


def _pick_row_tile(height, width, batch, target_bytes=4 << 20):
    """Rows per block: ~4 MiB/step, multiple of 8 (or the full height)."""
    w2 = 2 * width
    rows = max(8, (target_bytes // (w2 * 4) // 8) * 8)
    if rows < height:
        return rows
    # Whole image fits in a single block per batch element.
    if batch >= 2 or height <= 8:
        return height
    # batch == 1: split rows so both TensorCores (v7x) get independent work.
    half = ((height + 15) // 16) * 8
    return height if half >= height else half


def rotation3d_pallas(K, invK, R, height, width, eps=1e-07):
    """Pallas implementation of Rotation3D.forward.

    Args:
      K, invK, R: (B, 4, 4) float32.
    Returns:
      (B, H, W, 2) float32 normalized pixel coordinates in [-1, 1].
    """
    b = R.shape[0]
    K = K.astype(jnp.float32)
    invK = invK.astype(jnp.float32)
    R = R.astype(jnp.float32)

    # Tiny per-batch 3x3: M = (K @ R)[:3,:3] @ invK[:3,:3]  (done in XLA).
    P = jnp.matmul(K, R)[:, :3, :3]
    M = jnp.matmul(P, invK[:, :3, :3]).reshape(b, 9)

    w2 = 2 * width
    th = _pick_row_tile(height, width, b)
    n_row_blocks = pl.cdiv(height, th)

    kernel = functools.partial(
        _rotation3d_kernel,
        height=float(height), width=float(width), eps=float(eps))

    out = pl.pallas_call(
        kernel,
        out_shape=jax.ShapeDtypeStruct((b, height, w2), jnp.float32),
        grid=(b, n_row_blocks),
        in_specs=[pl.BlockSpec(memory_space=pltpu.MemorySpace.SMEM)],
        out_specs=pl.BlockSpec((1, th, w2), lambda bi, ri: (bi, ri, 0)),
        compiler_params=pltpu.CompilerParams(
            dimension_semantics=("parallel", "parallel")),
    )(M)

    # Interleaved (px, py) along the last axis -> free view to (B, H, W, 2).
    return out.reshape(b, height, width, 2)


def rotation3d_reference(K, invK, R, height, width, eps=1e-07):
    """Pure-JAX reference mirroring the PyTorch forward exactly."""
    b = R.shape[0]
    hw = height * width
    P = jnp.matmul(K, R)[:, :3, :3]
    xg, yg = jnp.meshgrid(jnp.arange(width, dtype=jnp.float32),
                          jnp.arange(height, dtype=jnp.float32),
                          indexing="xy")
    curr = jnp.stack([xg.reshape(-1), yg.reshape(-1)], axis=0)[None]   # (1,2,HW)
    ones = jnp.ones((1, 1, hw), jnp.float32)
    curr = jnp.concatenate([curr, ones], axis=1)
    curr = jnp.tile(curr, (b, 1, 1))
    back = jnp.matmul(invK[:, :3, :3], curr)
    rot = jnp.matmul(P, back)
    pix = rot[:, :2, :] / (rot[:, 2, :][:, None, :] + eps)
    pix = pix.reshape(b, 2, height, width).transpose(0, 2, 3, 1)
    pix = pix.at[..., 0].divide(width - 1)
    pix = pix.at[..., 1].divide(height - 1)
    return (pix - 0.5) * 2.0


def _make_inputs(batch, height, width, key):
    """Deterministic, physically-plausible K / invK / R."""
    fx, fy = 0.9 * width, 0.9 * height
    cx, cy = (width - 1) / 2.0, (height - 1) / 2.0
    K1 = np.array([[fx, 0.0, cx, 0.0],
                   [0.0, fy, cy, 0.0],
                   [0.0, 0.0, 1.0, 0.0],
                   [0.0, 0.0, 0.0, 1.0]], dtype=np.float32)
    K = np.tile(K1[None], (batch, 1, 1))
    invK = np.stack([np.linalg.inv(K1) for _ in range(batch)], axis=0)

    angles = np.asarray(jax.random.uniform(key, (batch, 3),
                                           minval=-0.2, maxval=0.2))
    Rs = []
    for a in angles:
        ax, ay, az = a
        Rx = np.array([[1, 0, 0], [0, np.cos(ax), -np.sin(ax)],
                       [0, np.sin(ax), np.cos(ax)]], dtype=np.float32)
        Ry = np.array([[np.cos(ay), 0, np.sin(ay)], [0, 1, 0],
                       [-np.sin(ay), 0, np.cos(ay)]], dtype=np.float32)
        Rz = np.array([[np.cos(az), -np.sin(az), 0],
                       [np.sin(az), np.cos(az), 0], [0, 0, 1]], dtype=np.float32)
        R3 = Rz @ Ry @ Rx
        R4 = np.eye(4, dtype=np.float32)
        R4[:3, :3] = R3
        Rs.append(R4)
    R = np.stack(Rs, axis=0)

    return (jnp.asarray(K, jnp.float32),
            jnp.asarray(invK, jnp.float32),
            jnp.asarray(R, jnp.float32))


if __name__ == "__main__":
    batch, height, width = 2, 16, 16
    key = jax.random.PRNGKey(0)
    K, invK, R = _make_inputs(batch, height, width, key)

    out = rotation3d_pallas(K, invK, R, height, width)
    out = jax.block_until_ready(out)

    ref = rotation3d_reference(K, invK, R, height, width)
    assert out.shape == (batch, height, width, 2), out.shape
    assert np.allclose(np.asarray(out), np.asarray(ref), atol=1e-4, rtol=1e-4)

    print("KERNEL_OK")
</pallas_src>

<mosaic_0001>
module attributes {stable_mosaic.version = 11 : i64} {
  func.func @_rotation3d_kernel(%arg0: i32, %arg1: i32, %arg2: memref<2x9xf32, #tpu.memory_space<smem>>, %arg3: memref<1x16x32xf32, #tpu.memory_space<vmem>>) attributes {dimension_semantics = [#tpu.dimension_semantics<parallel>, #tpu.dimension_semantics<parallel>], iteration_bounds = array<i64: 2, 1>, scalar_prefetch = 0 : i64, scratch_operands = 0 : i64, tpu.core_type = #tpu.core_type<tc>, window_params = [{transform_indices = @transform_0, window_bounds = array<i64: 2, 9>}, {transform_indices = @transform_1, window_bounds = array<i64: 1, 16, 32>}]} {
    %0 = tpu.iota {dimensions = array<i32: 2>} : vector<1x16x32xi32>
    %1 = tpu.iota {dimensions = array<i32: 1>} : vector<1x16x32xi32>
    %c1_i32 = arith.constant 1 : i32
    %2 = vector.broadcast %c1_i32 : i32 to vector<1x16x32xi32>
    %3 = arith.shrsi %0, %2 : vector<1x16x32xi32>
    %4 = arith.sitofp %3 : vector<1x16x32xi32> to vector<1x16x32xf32>
    %c1_i32_0 = arith.constant 1 : i32
    %5 = vector.broadcast %c1_i32_0 : i32 to vector<1x16x32xi32>
    %6 = arith.andi %0, %5 : vector<1x16x32xi32>
    %c16_i32 = arith.constant 16 : i32
    %7 = arith.muli %arg1, %c16_i32 : i32
    %8 = vector.broadcast %7 : i32 to vector<1x16x32xi32>
    %9 = arith.addi %1, %8 : vector<1x16x32xi32>
    %10 = arith.sitofp %9 : vector<1x16x32xi32> to vector<1x16x32xf32>
    %11 = arith.index_cast %arg0 : i32 to index
    %c0 = arith.constant 0 : index
    %12 = memref.load %arg2[%11, %c0] : memref<2x9xf32, #tpu.memory_space<smem>>
    %13 = arith.index_cast %arg0 : i32 to index
    %c1 = arith.constant 1 : index
    %14 = memref.load %arg2[%13, %c1] : memref<2x9xf32, #tpu.memory_space<smem>>
    %15 = arith.index_cast %arg0 : i32 to index
    %c2 = arith.constant 2 : index
    %16 = memref.load %arg2[%15, %c2] : memref<2x9xf32, #tpu.memory_space<smem>>
    %17 = arith.index_cast %arg0 : i32 to index
    %c3 = arith.constant 3 : index
    %18 = memref.load %arg2[%17, %c3] : memref<2x9xf32, #tpu.memory_space<smem>>
    %19 = arith.index_cast %arg0 : i32 to index
    %c4 = arith.constant 4 : index
    %20 = memref.load %arg2[%19, %c4] : memref<2x9xf32, #tpu.memory_space<smem>>
    %21 = arith.index_cast %arg0 : i32 to index
    %c5 = arith.constant 5 : index
    %22 = memref.load %arg2[%21, %c5] : memref<2x9xf32, #tpu.memory_space<smem>>
    %23 = arith.index_cast %arg0 : i32 to index
    %c6 = arith.constant 6 : index
    %24 = memref.load %arg2[%23, %c6] : memref<2x9xf32, #tpu.memory_space<smem>>
    %25 = arith.index_cast %arg0 : i32 to index
    %c7 = arith.constant 7 : index
    %26 = memref.load %arg2[%25, %c7] : memref<2x9xf32, #tpu.memory_space<smem>>
    %27 = arith.index_cast %arg0 : i32 to index
    %c8 = arith.constant 8 : index
    %28 = memref.load %arg2[%27, %c8] : memref<2x9xf32, #tpu.memory_space<smem>>
    %29 = vector.broadcast %12 : f32 to vector<1x16x32xf32>
    %30 = arith.mulf %29, %4 : vector<1x16x32xf32>
    %31 = vector.broadcast %14 : f32 to vector<1x16x32xf32>
    %32 = arith.mulf %31, %10 : vector<1x16x32xf32>
    %33 = arith.addf %30, %32 : vector<1x16x32xf32>
    %34 = vector.broadcast %16 : f32 to vector<1x16x32xf32>
    %35 = arith.addf %33, %34 : vector<1x16x32xf32>
    %36 = vector.broadcast %18 : f32 to vector<1x16x32xf32>
    %37 = arith.mulf %36, %4 : vector<1x16x32xf32>
    %38 = vector.broadcast %20 : f32 to vector<1x16x32xf32>
    %39 = arith.mulf %38, %10 : vector<1x16x32xf32>
    %40 = arith.addf %37, %39 : vector<1x16x32xf32>
    %41 = vector.broadcast %22 : f32 to vector<1x16x32xf32>
    %42 = arith.addf %40, %41 : vector<1x16x32xf32>
    %43 = vector.broadcast %24 : f32 to vector<1x16x32xf32>
    %44 = arith.mulf %43, %4 : vector<1x16x32xf32>
    %45 = vector.broadcast %26 : f32 to vector<1x16x32xf32>
    %46 = arith.mulf %45, %10 : vector<1x16x32xf32>
    %47 = arith.addf %44, %46 : vector<1x16x32xf32>
    %48 = vector.broadcast %28 : f32 to vector<1x16x32xf32>
    %49 = arith.addf %47, %48 : vector<1x16x32xf32>
    %cst = arith.constant 1.000000e-07 : f32
    %50 = vector.broadcast %cst : f32 to vector<1x16x32xf32>
    %51 = arith.addf %49, %50 : vector<1x16x32xf32>
    %52 = tpu.reciprocal %51 : vector<1x16x32xf32> -> vector<1x16x32xf32>
    %53 = arith.mulf %35, %52 : vector<1x16x32xf32>
    %cst_1 = arith.constant 0.13333334 : f32
    %54 = vector.broadcast %cst_1 : f32 to vector<1x16x32xf32>
    %55 = arith.mulf %53, %54 : vector<1x16x32xf32>
    %cst_2 = arith.constant 1.000000e+00 : f32
    %56 = vector.broadcast %cst_2 : f32 to vector<1x16x32xf32>
    %57 = arith.subf %55, %56 : vector<1x16x32xf32>
    %58 = arith.mulf %42, %52 : vector<1x16x32xf32>
    %cst_3 = arith.constant 0.13333334 : f32
    %59 = vector.broadcast %cst_3 : f32 to vector<1x16x32xf32>
    %60 = arith.mulf %58, %59 : vector<1x16x32xf32>
    %cst_4 = arith.constant 1.000000e+00 : f32
    %61 = vector.broadcast %cst_4 : f32 to vector<1x16x32xf32>
    %62 = arith.subf %60, %61 : vector<1x16x32xf32>
    %c0_i32 = arith.constant 0 : i32
    %63 = vector.broadcast %c0_i32 : i32 to vector<1x16x32xi32>
    %64 = arith.cmpi eq, %6, %63 : vector<1x16x32xi32>
    %65 = arith.select %64, %57, %62 : vector<1x16x32xi1>, vector<1x16x32xf32>
    %c0_5 = arith.constant 0 : index
    %c0_6 = arith.constant 0 : index
    %c0_7 = arith.constant 0 : index
    %66 = vector.load %arg3[%c0_5, %c0_6, %c0_7] : memref<1x16x32xf32, #tpu.memory_space<vmem>>, vector<1x16x32xf32>
    tpu.vector_store %arg3[%c0_5, %c0_6, %c0_7], %65 {strides = array<i32>} : memref<1x16x32xf32, #tpu.memory_space<vmem>>, vector<1x16x32xf32>,
    return
  }
  func.func @transform_0(%arg0: i32, %arg1: i32) -> (i32, i32) {
    %c0_i32 = arith.constant 0 : i32
    %c0_i32_0 = arith.constant 0 : i32
    %c0_i32_1 = arith.constant 0 : i32
    return %c0_i32, %c0_i32_0 : i32, i32
  }
  func.func @transform_1(%arg0: i32, %arg1: i32) -> (i32, i32, i32) {
    %c0_i32 = arith.constant 0 : i32
    %c0_i32_0 = arith.constant 0 : i32
    return %arg0, %arg1, %c0_i32 : i32, i32, i32
  }
}

</mosaic_0001>

<llo_original>
// kernel: tpu_custom_call.1
$region0: #{tpu_custom_call.1}
  #allocation0 [shape = 'u32[]', space=smem, size = 0x4, offset = 0x4, fixed_abs, tag = 'smem constant byte address 0x4 - core index']
  #allocation1 [shape = 'u32[72,128]{1,0:T(1,128)}', space=vmem, size = 0x9000, scoped, tag = 'internal scratch']
  %s0 = inlined_call_operand.hbm [shape: f32[2,9], index: 0, kind: input, shape index: {}]
  %s1 = inlined_call_operand.hbm [shape: f32[2,16,32], index: 1, kind: output, shape index: {}]
  %s2 = sld [smem:[#allocation0]]
  $region41: #{tpu_custom_call.1} parent=0
    _
  %s4 = ssub.s32 1, %s2
  %s5 = scalar_select 0, %s4, %s2
  $region1: #{tpu_custom_call.1} parent=0
    #allocation2 [shape = 'u8[1024]{0}', space=smem, size = 0x400, scoped, tag = 'input window, operand 0, single buffered']
    #allocation3 [shape = 's32[2]{0}', space=sflag, size = 0x8, scoped, tag = 'scoped memory for tpu_custom_call.1']
    #allocation4 [shape = 's32[2]{0}', space=sflag, size = 0x8, scoped, tag = 'scoped memory for tpu_custom_call.1']
    #allocation5 [shape = 'u8[16384]{0}', space=vmem, size = 0x4000, scoped, tag = 'output window, operand 0']
    %6 = vsyncpa [#allocation4], 0
    %7 = vsyncpa [#allocation3], 0
    %s8 = scalar_lea.sflag [#allocation3], 1
    %9 = vsyncpa %s8, 0
    loop: start=0, step=1, limit=4
    $region2: #{tpu_custom_call.1} parent=1 // loop_pre_header
      _
    $region3: #{tpu_custom_call.1} parent=1 // loop_header
      %s11 = sphi 0, %s15
      %p12 = scmp.ge.s32.totalorder %s11, 4
      %s18 = sphi 0, %s30
      %s19 = sphi 0, %s26
      %s20 = sphi 0, %s18
      %s21 = sphi 0, %s19
      %s22 = sphi 0, %s20
      %s23 = sphi 0, %s21
      %s31 = sphi 0, %s31
      %s33 = sphi 0, %s31
      %s34 = sphi 0, %s33
      %s48 = sphi 0, %s34
      %s56 = sphi 0, %s58
      %s59 = sphi 0, %s56
      %s60 = sphi 0, %s59
      %s76 = sphi 0, %s60
    $region4: #{tpu_custom_call.1} parent=1 // loop_header_branch
      %14 = sbr.rel (%p12) target = $region8
    $region5: #{tpu_custom_call.1} parent=1 // loop_body
      %s16 = ssub.s32 %s11, 1
      %s17 = ssub.s32 %s11, 2
      %s24 = sadd.s32 1, %s19
      %p25 = scmp.ge.s32.totalorder %s24, 1
      %s26 = scalar_select %p25, 0, %s24
      %s27 = sadd.s32 1, %s18
      %s28 = scalar_select %p25, %s27, %s18
      %p29 = scmp.ge.s32.totalorder %s28, 2
      %s30 = scalar_select %p29, 0, %s28
      %s32 = sadd.s32 %s31, 1
      %p35 = scmp.eq.s32.totalorder %s11, 1
      %p36 = scmp.ne.s32.totalorder %s31, %s33
      %p37 = scmp.eq.s32.totalorder %s11, 0
      %p38 = por %p36, %p37
      %p39 = scmp.ne.s32.totalorder %s31, %s33
      %p40 = scmp.eq.s32.totalorder %s16, 1
      %p41 = por %p39, %p40
      %p42 = scmp.ne.s32.totalorder %s33, %s34
      %p43 = scmp.eq.s32.totalorder %s16, 0
      %p44 = por %p42, %p43
      %p45 = scmp.ne.s32.totalorder %s33, %s34
      %p46 = scmp.eq.s32.totalorder %s17, 1
      %p47 = por %p45, %p46
      %p49 = scmp.ne.s32.totalorder %s34, %s48
      %p50 = scmp.eq.s32.totalorder %s17, 0
      %p51 = por %p49, %p50
      %s52 = ssub.s32 %s18, %s30
      %s53 = ssub.s32 %s19, %s26
      %s54 = sor.u32 %s52, %s53
      %p55 = scmp.eq.s32.totalorder %s54, 0
      %s57 = sadd.s32 %s56, 1
      %s58 = scalar_select %p55, %s56, %s57
      %p61 = pneg %p55
      %p62 = scmp.eq.s32.totalorder %s11, 1
      %p63 = por %p61, %p62
      %p64 = scmp.ne.s32.totalorder %s56, %s59
      %p65 = scmp.eq.s32.totalorder %s11, 0
      %p66 = por %p64, %p65
      %p67 = scmp.ne.s32.totalorder %s56, %s59
      %p68 = scmp.eq.s32.totalorder %s16, 1
      %p69 = por %p67, %p68
      %p70 = scmp.ne.s32.totalorder %s59, %s60
      %p71 = scmp.eq.s32.totalorder %s16, 0
      %p72 = por %p70, %p71
      %p73 = scmp.ne.s32.totalorder %s59, %s60
      %p74 = scmp.eq.s32.totalorder %s17, 1
      %p75 = por %p73, %p74
      %p77 = scmp.ne.s32.totalorder %s60, %s76
      %p78 = scmp.eq.s32.totalorder %s17, 0
      %p79 = por %p77, %p78
      %p80 = scmp.le.s32.totalorder 1, %s11
      %p81 = scmp.lt.s32.totalorder %s11, 3
      %p82 = pnand %p80, %p81
      %p83 = pneg %p82
      // Predicated region
      $region9: #{tpu_custom_call.1} parent=5 // pred_check
        _
      $region10: #{tpu_custom_call.1} parent=5 // pred_check_branch
        %85 = sbr.rel (%p82) target = $region12
      $region11: #{tpu_custom_call.1} parent=5 // pred_region
        %s86 = ssub.s32 %s11, 1
        // Predicated region
        $region13: #{tpu_custom_call.1} parent=11 // pred_check
          %p87 = pneg %p44
        $region14: #{tpu_custom_call.1} parent=11 // pred_check_branch
          %89 = sbr.rel (%p87) target = $region16
        $region15: #{tpu_custom_call.1} parent=11 // pred_region
          %91 = vsyncadd [#allocation4], 0
          %s93 = sshll.u32 %s0, 4
          %s94 = int_to_ptr.hbm [resolvable:$true] %s93
          %96 = dma.hbm_to_smem %s94, 32, [#allocation2], [#allocation4]
        $region16: #{tpu_custom_call.1} parent=11 // pred_fallthru
          _
      $region12: #{tpu_custom_call.1} parent=5 // pred_fallthru
        _
      %p97 = scmp.lt.s32.totalorder %s11, 2
      // Predicated region
      $region17: #{tpu_custom_call.1} parent=5 // pred_check
        %p98 = pneg %p97
      $region18: #{tpu_custom_call.1} parent=5 // pred_check_branch
        %100 = sbr.rel (%p98) target = $region20
      $region19: #{tpu_custom_call.1} parent=5 // pred_region
        _
      $region20: #{tpu_custom_call.1} parent=5 // pred_fallthru
        _
      %p101 = scmp.le.s32.totalorder 1, %s11
      %p102 = scmp.lt.s32.totalorder %s11, 3
      %p103 = pnand %p101, %p102
      %p104 = pneg %p103
      // Predicated region
      $region21: #{tpu_custom_call.1} parent=5 // pred_check
        _
      $region22: #{tpu_custom_call.1} parent=5 // pred_check_branch
        %106 = sbr.rel (%p103) target = $region24
      $region23: #{tpu_custom_call.1} parent=5 // pred_region
        %s107 = ssub.s32 %s11, 1
        // Predicated region
        $region25: #{tpu_custom_call.1} parent=23 // pred_check
          %p108 = pneg %p44
        $region26: #{tpu_custom_call.1} parent=23 // pred_check_branch
          %110 = sbr.rel (%p108) target = $region28
        $region27: #{tpu_custom_call.1} parent=23 // pred_region
          %112 = dma.done [#allocation4], 32
        $region28: #{tpu_custom_call.1} parent=23 // pred_fallthru
          _
        %113 = sfence
        %p114 = pneg %p44
        %p115 = pneg %p41
        %p116 = pneg %p72
        %p117 = pneg %p69
        %s118 = sand.u32 %s59, 1
        %s119 = scalar_lea.sflag [#allocation3], %s118
        %s120 = sand.u32 %s59, 1
        %s121 = smul.addr %s120, 16
        %s122 = scalar_lea.vmem [#allocation5], %s121
        %s123 = smul.u32 2, %s21
        %v124 = vlaneseq
        %v125 = vand.u32 %v124, 127
        %v126 = vlaneseq
        %v127 = vshrl.u32 %v126, 7
        %v128 = vadd.s32 %v127, 8
        %v129 = vshra.s32 %v125, 1
        %v130 = vcvt.s32.f32 %v129
        %v131 = vand.u32 %v125, 1
        %s132 = smul.u32 %s21, 16
        %v133 = vstv %s132
        %v134 = vadd.s32 %v127, %v133
        %v135 = vadd.s32 %v128, %v133
        %v136 = vcvt.s32.f32 %v134
        %v137 = vcvt.s32.f32 %v135
        %s138 = smul.u32 %s20, 128
        %s139 = sld [smem:[#allocation2 + %s138]]
        %s140 = sadd.s32 %s138, 1
        %s141 = sld [smem:[#allocation2 + %s140]]
        %s142 = sadd.s32 %s138, 2
        %s143 = sld [smem:[#allocation2 + %s142]]
        %s144 = sadd.s32 %s138, 3
        %s145 = sld [smem:[#allocation2 + %s144]]
        %s146 = sadd.s32 %s138, 4
        %s147 = sld [smem:[#allocation2 + %s146]]
        %s148 = sadd.s32 %s138, 5
        %s149 = sld [smem:[#allocation2 + %s148]]
        %s150 = sadd.s32 %s138, 6
        %s151 = sld [smem:[#allocation2 + %s150]]
        %s152 = sadd.s32 %s138, 7
        %s153 = sld [smem:[#allocation2 + %s152]]
        %s154 = sadd.s32 %s138, 8
        %s155 = sld [smem:[#allocation2 + %s154]]
        %v156 = vstv %s139
        %v157 = vmul.f32 %v156, %v130
        %v158 = vstv %s141
        %v159 = vmul.f32 %v158, %v136
        %v160 = vmul.f32 %v158, %v137
        %v161 = vadd.f32 %v157, %v159
        %v162 = vadd.f32 %v157, %v160
        %v163 = vstv %s143
        %v164 = vadd.f32 %v161, %v163
        %v165 = vadd.f32 %v162, %v163
        %v166 = vstv %s145
        %v167 = vmul.f32 %v166, %v130
        %v168 = vstv %s147
        %v169 = vmul.f32 %v168, %v136
        %v170 = vmul.f32 %v168, %v137
        %v171 = vadd.f32 %v167, %v169
        %v172 = vadd.f32 %v167, %v170
        %v173 = vstv %s149
        %v174 = vadd.f32 %v171, %v173
        %v175 = vadd.f32 %v172, %v173
        %v176 = vstv %s151
        %v177 = vmul.f32 %v176, %v130
        %v178 = vstv %s153
        %v179 = vmul.f32 %v178, %v136
        %v180 = vmul.f32 %v178, %v137
        %v181 = vadd.f32 %v177, %v179
        %v182 = vadd.f32 %v177, %v180
        %v183 = vstv %s155
        %v184 = vadd.f32 %v181, %v183
        %v185 = vadd.f32 %v182, %v183
        %v186 = vadd.f32 %v184, 1e-07
        %v187 = vadd.f32 %v185, 1e-07
        %v188 = vrcp.pop %v186
        %v189 = vmul.f32 %v186, %v188
        %v190 = vsub.f32 1.0, %v189
        %v191 = vmul.f32 %v188, %v190
        %v192 = vadd.f32 %v188, %v191
        %vm193 = vweird.f32 %v186
        %vm194 = vweird.f32 %v188
        %vm195 = vmor %vm193, %vm194
        %v196 = vsel %vm195, %v188, %v192
        %v197 = vand.u32 2147483647, %v186
        %vm198 = vcmp.eq.f32.partialorder %v197, 8.507059e+37
        %v199 = vand.u32 %v186, 2147483648
        %v200 = vor.u32 1.1754944e-38, %v199
        %v201 = vsel %vm198, %v200, %v196
        %v202 = vrcp.pop %v187
        %v203 = vmul.f32 %v187, %v202
        %v204 = vsub.f32 1.0, %v203
        %v205 = vmul.f32 %v202, %v204
        %v206 = vadd.f32 %v202, %v205
        %vm207 = vweird.f32 %v187
        %vm208 = vweird.f32 %v202
        %vm209 = vmor %vm207, %vm208
        %v210 = vsel %vm209, %v202, %v206
        %v211 = vand.u32 2147483647, %v187
        %vm212 = vcmp.eq.f32.partialorder %v211, 8.507059e+37
        %v213 = vand.u32 %v187, 2147483648
        %v214 = vor.u32 1.1754944e-38, %v213
        %v215 = vsel %vm212, %v214, %v210
        %v216 = vmul.f32 %v164, %v201
        %v217 = vmul.f32 %v165, %v215
        %v218 = vmul.f32 %v216, 0.13333334
        %v219 = vmul.f32 %v217, 0.13333334
        %v220 = vsub.f32 %v218, 1.0
        %v221 = vsub.f32 %v219, 1.0
        %v222 = vmul.f32 %v174, %v201
        %v223 = vmul.f32 %v175, %v215
        %v224 = vmul.f32 %v222, 0.13333334
        %v225 = vmul.f32 %v223, 0.13333334
        %v226 = vsub.f32 %v224, 1.0
        %v227 = vsub.f32 %v225, 1.0
        %vm228 = vcmp.eq.s32.totalorder %v131, 0
        %v229 = vsel %vm228, %v220, %v226
        %v230 = vsel %vm228, %v221, %v227
        %vm231 = vcmask 261120
        %232 = vst.msk [vmem:[%s122] sm:$0xff] %vm231, %v229
        %233 = vst.msk [vmem:[%s122 + $0x8] sm:$0xff] %vm231, %v230
        %s234 = sand.u32 %s59, 1
        %s235 = scalar_lea.sflag [#allocation3], %s234
        %s236 = sand.u32 %s59, 1
        %s237 = smul.addr %s236, 16
        %s238 = scalar_lea.vmem [#allocation5], %s237
        // Predicated region
        $region29: #{tpu_custom_call.1} parent=23 // pred_check
          %p239 = pneg %p69
        $region30: #{tpu_custom_call.1} parent=23 // pred_check_branch
          %241 = sbr.rel (%p239) target = $region32
        $region31: #{tpu_custom_call.1} parent=23 // pred_region
          %s242 = smul.u32 2, %s21
          %244 = vsyncadd %s235, 0
          %s245 = smul.addr %s20, 2
          %s246 = sadd.s32 %s242, %s245
          %s247 = smul.addr %s246, 8
          %s248 = scalar_lea.hbm %s1, %s247
          %s249 = sshll.u32 %s238, 4
          %s250 = int_to_ptr.vmem [resolvable:$true] %s249
          %s251 = sshll.u32 %s248, 4
          %s252 = int_to_ptr.hbm [resolvable:$true] %s251
          %257 = dma.vmem_to_hbm [thread:$0]  %s250, 256, %s252, %s235, 128, 128, 8
        $region32: #{tpu_custom_call.1} parent=23 // pred_fallthru
          _
      $region24: #{tpu_custom_call.1} parent=5 // pred_fallthru
        _
      %p258 = scmp.le.s32.totalorder 2, %s11
      // Predicated region
      $region33: #{tpu_custom_call.1} parent=5 // pred_check
        %p259 = pneg %p258
      $region34: #{tpu_custom_call.1} parent=5 // pred_check_branch
        %261 = sbr.rel (%p259) target = $region36
      $region35: #{tpu_custom_call.1} parent=5 // pred_region
        %s262 = ssub.s32 %s11, 2
        // Predicated region
        $region37: #{tpu_custom_call.1} parent=35 // pred_check
          %p263 = pneg %p75
        $region38: #{tpu_custom_call.1} parent=35 // pred_check_branch
          %265 = sbr.rel (%p263) target = $region40
        $region39: #{tpu_custom_call.1} parent=35 // pred_region
          %s266 = sand.u32 %s60, 1
          %s267 = scalar_lea.sflag [#allocation3], %s266
          %s268 = sand.u32 %s60, 1
          %s269 = smul.addr %s268, 16
          %s270 = scalar_lea.vmem [#allocation5], %s269
          %272 = dma.done %s267, 256
        $region40: #{tpu_custom_call.1} parent=35 // pred_fallthru
          _
      $region36: #{tpu_custom_call.1} parent=5 // pred_fallthru
        _
    $region6: #{tpu_custom_call.1} parent=1 // loop_footer
      %s15 = sadd.s32 1, %s11
    $region7: #{tpu_custom_call.1} parent=1 // loop_footer_branch
      %10 = sbr.rel target = $region3
    $region8: #{tpu_custom_call.1} parent=1 // loop_exit
      _
    %273 = vsyncpa [#allocation3], 1
    %s274 = scalar_lea.sflag [#allocation3], 1
    %275 = vsyncpa %s274, 1
    %276 = vsyncpa [#allocation4], 1
    %s277 = scalar_lea.sflag [#allocation4], 1
    %278 = vsyncpa %s277, 1

</llo_original>
